<compile_context>
chip_gen: v6e
topology: v6e:2x2x1
jax: 0.10.0
libtpu: 0.0.40
codegen_flags: <defaults>
</compile_context>

<pallas_src>
import math
from functools import partial

import jax
import jax.numpy as jnp
import numpy as np
from jax import lax
from jax.experimental import pallas as pl
from jax.experimental.pallas import tpu as pltpu

NUM_HARMONICS = 155
TWO_PI = 2.0 * math.pi
PI = math.pi


def _cdiv(a, b):
    return -(-a // b)


def _round_up(x, m):
    return _cdiv(x, m) * m


def _pulse_train_kernel(up_ref, cum_ref, out_ref, *, num_harmonics, chunk_rows):
    """One grid step = one (rows_per_tile, lanes) slab of flattened (b, t) points.

    Processes the slab in chunk_rows-row chunks so all intermediates stay
    vreg-resident, with a single lane-dense store per chunk.
    """
    rows, _ = up_ref.shape
    n_chunks = rows // chunk_rows
    nh = jnp.float32(num_harmonics)

    @pl.loop(0, n_chunks)
    def _(c):
        r = pl.multiple_of(c * chunk_rows, chunk_rows)
        up = up_ref[pl.ds(r, chunk_rows), :]          # (chunk_rows, lanes)
        cum = cum_ref[pl.ds(r, chunk_rows), :]        # cumsum_t(up), precomputed

        # Range reduction: sin(2*pi*k*cum) == sin(2*pi*k*frac(cum)) for integer k.
        frac = cum - jnp.floor(cum)                   # in [0, 1)
        half = jnp.float32(PI) * frac                 # theta/2, in [0, pi)

        # K = number of harmonics k in [1, num_harmonics] with fl(up*k) < 0.5.
        # floor(0.5/up) can be off-by-one at exact-boundary roundings vs. the
        # reference's `up*k >= 0.5` compare, so fix up with the same compare.
        K = jnp.minimum(jnp.floor(0.5 / up), nh)      # up==0 -> inf -> clamp
        K = jnp.where(up * K >= 0.5, K - 1.0, K)
        K = jnp.where((K < nh) & (up * (K + 1.0) < 0.5), K + 1.0, K)

        # Closed-form Dirichlet partial sum of sum_{k=1..K} sin(k*theta).
        s_half = jnp.sin(half)
        num = jnp.sin(K * half) * jnp.sin((K + 1.0) * half)
        safe = jnp.abs(s_half) > 1e-4
        denom = jnp.where(safe, s_half, 1.0)          # avoid 0/0 -> NaN
        # Small-angle fallback near theta ≡ 0 (mod 2*pi): sum ≈ resid*K(K+1)/2,
        # with resid the signed residual angle in radians.
        resid = jnp.float32(TWO_PI) * jnp.where(frac > 0.5, frac - 1.0, frac)
        fallback = resid * (0.5 * K * (K + 1.0))
        acc = jnp.where(safe, num / denom, fallback)

        amp = jnp.sqrt(up + up)                       # == rsqrt(0.5 / up)
        out_ref[pl.ds(r, chunk_rows), :] = amp * acc


@partial(jax.jit,
         static_argnames=("num_harmonics", "lanes", "rows_per_tile", "chunk_rows"))
def additive_pulse_train(upsampled_phase, num_harmonics=NUM_HARMONICS, *,
                         lanes=512, rows_per_tile=512, chunk_rows=8):
    """Pallas TPU forward of AdditivePulseTrain (hop_length == 1)."""
    assert upsampled_phase.ndim == 2, upsampled_phase.shape
    assert lanes % 128 == 0
    assert chunk_rows % 8 == 0 and rows_per_tile % chunk_rows == 0

    B, T = upsampled_phase.shape
    up = upsampled_phase.astype(jnp.float32)
    # Sequential prefix over time is done once here (cheap, O(T)), not in-kernel.
    cum = jnp.cumsum(up, axis=1)

    # Flatten + zero-pad to a lane/sublane-dense slab; padding (up=0, cum=0)
    # contributes exactly zero (amp = sqrt(0) = 0) and is sliced away below.
    N = B * T
    total_rows = _round_up(_cdiv(N, lanes), 8)
    rpt = min(rows_per_tile, total_rows)
    # v7x megacore: make sure the "parallel" grid axis has >= 2 tiles whenever
    # the data is big enough to split at sublane (8-row) granularity.
    if total_rows >= 16 and _cdiv(total_rows, rpt) < 2:
        rpt = _round_up(_cdiv(total_rows, 2), 8)
    rpt = _round_up(rpt, chunk_rows)
    n_tiles = _cdiv(total_rows, rpt)
    padded_rows = n_tiles * rpt
    pad = padded_rows * lanes - N

    def to_slab(x):
        flat = x.reshape(-1)
        if pad:
            flat = jnp.pad(flat, (0, pad))
        return flat.reshape(padded_rows, lanes)

    up_slab, cum_slab = to_slab(up), to_slab(cum)

    kernel = partial(_pulse_train_kernel,
                     num_harmonics=num_harmonics, chunk_rows=chunk_rows)

    n_elems = padded_rows * lanes
    cost = pl.CostEstimate(flops=40 * n_elems,
                           transcendentals=3 * n_elems,
                           bytes_accessed=12 * n_elems)

    out_slab = pl.pallas_call(
        kernel,
        out_shape=jax.ShapeDtypeStruct((padded_rows, lanes), jnp.float32),
        grid_spec=pltpu.PrefetchScalarGridSpec(
            num_scalar_prefetch=0,
            grid=(n_tiles,),
            in_specs=[pl.BlockSpec((rpt, lanes), lambda i: (i, 0)),
                      pl.BlockSpec((rpt, lanes), lambda i: (i, 0))],
            out_specs=pl.BlockSpec((rpt, lanes), lambda i: (i, 0)),
        ),
        compiler_params=pltpu.CompilerParams(
            dimension_semantics=("parallel",)),       # tiles are independent
        cost_estimate=cost,
    )(up_slab, cum_slab)

    return out_slab.reshape(-1)[:N].reshape(B, T)


def reference(up, num_harmonics=NUM_HARMONICS):
    """Pure-JAX transcription of the PyTorch forward (hop_length == 1)."""
    up = up.astype(jnp.float32)
    k = jnp.arange(1, num_harmonics + 1, dtype=jnp.float32)
    harm = up[..., None] * k
    alias_mask = harm >= 0.5
    phase = jnp.cumsum(harm, axis=1)
    amp = jnp.broadcast_to(lax.rsqrt(0.5 / up)[..., None], harm.shape)
    amp = jnp.where(alias_mask, 0.0, amp)
    return jnp.sum(jnp.sin(phase * TWO_PI) * amp, axis=-1)


if __name__ == "__main__":
    key = jax.random.PRNGKey(0)
    B, T = 4, 320
    # upsampled phase in (0, 0.5] as required by check_input_hook
    up = jax.random.uniform(key, (B, T), minval=0.08, maxval=0.3,
                            dtype=jnp.float32)

    ref = reference(up)

    # Default tiling (single tile at this tiny size; 1 MiB blocks for real sizes).
    out = jax.block_until_ready(additive_pulse_train(up))
    np.testing.assert_allclose(np.asarray(out), np.asarray(ref),
                               atol=2e-2, rtol=1e-2)

    # Small tiles: exercises a multi-step grid + tail padding.
    out_small = jax.block_until_ready(
        additive_pulse_train(up, lanes=128, rows_per_tile=8))
    np.testing.assert_allclose(np.asarray(out_small), np.asarray(ref),
                               atol=2e-2, rtol=1e-2)

    print("KERNEL_OK")
</pallas_src>

<mosaic_0001>
module attributes {stable_mosaic.version = 11 : i64} {
  func.func @_pulse_train_kernel(%arg0: i32, %arg1: memref<8x512xf32, #tpu.memory_space<vmem>>, %arg2: memref<8x512xf32, #tpu.memory_space<vmem>>, %arg3: memref<8x512xf32, #tpu.memory_space<vmem>>) attributes {dimension_semantics = [#tpu.dimension_semantics<parallel>], iteration_bounds = array<i64: 1>, scalar_prefetch = 0 : i64, scratch_operands = 0 : i64, tpu.core_type = #tpu.core_type<tc>, window_params = [{transform_indices = @transform_0, window_bounds = array<i64: 8, 512>}, {transform_indices = @transform_1, window_bounds = array<i64: 8, 512>}, {transform_indices = @transform_2, window_bounds = array<i64: 8, 512>}]} {
    %cst = arith.constant 1.550000e+02 : f32
    %c0_i32 = arith.constant 0 : i32
    %c1_i32 = arith.constant 1 : i32
    %0 = arith.muli %c0_i32, %c1_i32 : i32
    %c0_i32_0 = arith.constant 0 : i32
    %1 = arith.addi %c0_i32_0, %0 : i32
    %c8_i32 = arith.constant 8 : i32
    %2 = arith.muli %1, %c8_i32 : i32
    %3 = tpu.assume_multiple %2, 8 : i32
    %4 = arith.index_cast %3 : i32 to index
    %c0 = arith.constant 0 : index
    %5 = vector.load %arg1[%4, %c0] : memref<8x512xf32, #tpu.memory_space<vmem>>, vector<8x512xf32>
    %6 = arith.index_cast %3 : i32 to index
    %c0_1 = arith.constant 0 : index
    %7 = vector.load %arg2[%6, %c0_1] : memref<8x512xf32, #tpu.memory_space<vmem>>, vector<8x512xf32>
    %8 = math.floor %7 : vector<8x512xf32>
    %9 = arith.subf %7, %8 : vector<8x512xf32>
    %cst_2 = arith.constant 3.14159274 : f32
    %10 = vector.broadcast %cst_2 : f32 to vector<8x512xf32>
    %11 = arith.mulf %10, %9 : vector<8x512xf32>
    %cst_3 = arith.constant 5.000000e-01 : f32
    %12 = vector.broadcast %cst_3 : f32 to vector<8x512xf32>
    %13 = arith.divf %12, %5 : vector<8x512xf32>
    %14 = math.floor %13 : vector<8x512xf32>
    %15 = vector.broadcast %cst : f32 to vector<8x512xf32>
    %16 = arith.minimumf %14, %15 : vector<8x512xf32>
    %17 = arith.mulf %5, %16 : vector<8x512xf32>
    %cst_4 = arith.constant 5.000000e-01 : f32
    %18 = vector.broadcast %cst_4 : f32 to vector<8x512xf32>
    %19 = arith.cmpf oge, %17, %18 : vector<8x512xf32>
    %cst_5 = arith.constant 1.000000e+00 : f32
    %20 = vector.broadcast %cst_5 : f32 to vector<8x512xf32>
    %21 = arith.subf %16, %20 : vector<8x512xf32>
    %22 = arith.select %19, %21, %16 : vector<8x512xi1>, vector<8x512xf32>
    %23 = vector.broadcast %cst : f32 to vector<8x512xf32>
    %24 = arith.cmpf olt, %22, %23 : vector<8x512xf32>
    %cst_6 = arith.constant 1.000000e+00 : f32
    %25 = vector.broadcast %cst_6 : f32 to vector<8x512xf32>
    %26 = arith.addf %22, %25 : vector<8x512xf32>
    %27 = arith.mulf %5, %26 : vector<8x512xf32>
    %cst_7 = arith.constant 5.000000e-01 : f32
    %28 = vector.broadcast %cst_7 : f32 to vector<8x512xf32>
    %29 = arith.cmpf olt, %27, %28 : vector<8x512xf32>
    %30 = arith.andi %24, %29 : vector<8x512xi1>
    %cst_8 = arith.constant 1.000000e+00 : f32
    %31 = vector.broadcast %cst_8 : f32 to vector<8x512xf32>
    %32 = arith.addf %22, %31 : vector<8x512xf32>
    %33 = arith.select %30, %32, %22 : vector<8x512xi1>, vector<8x512xf32>
    %34 = math.sin %11 : vector<8x512xf32>
    %35 = arith.mulf %33, %11 : vector<8x512xf32>
    %36 = math.sin %35 : vector<8x512xf32>
    %cst_9 = arith.constant 1.000000e+00 : f32
    %37 = vector.broadcast %cst_9 : f32 to vector<8x512xf32>
    %38 = arith.addf %33, %37 : vector<8x512xf32>
    %39 = arith.mulf %38, %11 : vector<8x512xf32>
    %40 = math.sin %39 : vector<8x512xf32>
    %41 = arith.mulf %36, %40 : vector<8x512xf32>
    %42 = math.absf %34 : vector<8x512xf32>
    %cst_10 = arith.constant 9.99999974E-5 : f32
    %43 = vector.broadcast %cst_10 : f32 to vector<8x512xf32>
    %44 = arith.cmpf ogt, %42, %43 : vector<8x512xf32>
    %cst_11 = arith.constant 1.000000e+00 : f32
    %45 = vector.broadcast %cst_11 : f32 to vector<8x512xf32>
    %46 = arith.select %44, %34, %45 : vector<8x512xi1>, vector<8x512xf32>
    %cst_12 = arith.constant 5.000000e-01 : f32
    %47 = vector.broadcast %cst_12 : f32 to vector<8x512xf32>
    %48 = arith.cmpf ogt, %9, %47 : vector<8x512xf32>
    %cst_13 = arith.constant 1.000000e+00 : f32
    %49 = vector.broadcast %cst_13 : f32 to vector<8x512xf32>
    %50 = arith.subf %9, %49 : vector<8x512xf32>
    %51 = arith.select %48, %50, %9 : vector<8x512xi1>, vector<8x512xf32>
    %cst_14 = arith.constant 6.28318548 : f32
    %52 = vector.broadcast %cst_14 : f32 to vector<8x512xf32>
    %53 = arith.mulf %52, %51 : vector<8x512xf32>
    %cst_15 = arith.constant 5.000000e-01 : f32
    %54 = vector.broadcast %cst_15 : f32 to vector<8x512xf32>
    %55 = arith.mulf %54, %33 : vector<8x512xf32>
    %cst_16 = arith.constant 1.000000e+00 : f32
    %56 = vector.broadcast %cst_16 : f32 to vector<8x512xf32>
    %57 = arith.addf %33, %56 : vector<8x512xf32>
    %58 = arith.mulf %55, %57 : vector<8x512xf32>
    %59 = arith.mulf %53, %58 : vector<8x512xf32>
    %60 = arith.divf %41, %46 : vector<8x512xf32>
    %61 = arith.select %44, %60, %59 : vector<8x512xi1>, vector<8x512xf32>
    %62 = arith.addf %5, %5 : vector<8x512xf32>
    %63 = math.sqrt %62 : vector<8x512xf32>
    %64 = arith.mulf %63, %61 : vector<8x512xf32>
    %65 = arith.index_cast %3 : i32 to index
    %c0_17 = arith.constant 0 : index
    %66 = vector.load %arg3[%65, %c0_17] : memref<8x512xf32, #tpu.memory_space<vmem>>, vector<8x512xf32>
    tpu.vector_store %arg3[%65, %c0_17], %64 {strides = array<i32>} : memref<8x512xf32, #tpu.memory_space<vmem>>, vector<8x512xf32>,
    %c1_i32_18 = arith.constant 1 : i32
    return
  }
  func.func @transform_0(%arg0: i32) -> (i32, i32) {
    %c0_i32 = arith.constant 0 : i32
    %c0_i32_0 = arith.constant 0 : i32
    return %arg0, %c0_i32 : i32, i32
  }
  func.func @transform_1(%arg0: i32) -> (i32, i32) {
    %c0_i32 = arith.constant 0 : i32
    %c0_i32_0 = arith.constant 0 : i32
    return %arg0, %c0_i32 : i32, i32
  }
  func.func @transform_2(%arg0: i32) -> (i32, i32) {
    %c0_i32 = arith.constant 0 : i32
    %c0_i32_0 = arith.constant 0 : i32
    return %arg0, %c0_i32 : i32, i32
  }
}

</mosaic_0001>

<llo_original>
// kernel: additive_pulse_train.1
$region0: #{additive_pulse_train.1}
  #allocation0 [shape = 'u32[]', space=smem, size = 0x4, offset = 0x4, fixed_abs, tag = 'smem constant byte address 0x4 - core index']
  #allocation1 [shape = 'u32[144,128]{1,0:T(1,128)}', space=vmem, size = 0x12000, scoped, tag = 'internal scratch']
  %s0 = inlined_call_operand.vmem [shape: f32[8,512], index: 0, kind: input, shape index: {}]
  %s1 = inlined_call_operand.vmem [shape: f32[8,512], index: 1, kind: input, shape index: {}]
  %s2 = inlined_call_operand.vmem [shape: f32[8,512], index: 2, kind: output, shape index: {}]
  %s3 = sld [smem:[#allocation0]]
  $region18: #{additive_pulse_train.1} parent=0
    _
  %s5 = ssub.s32 1, %s3
  %s6 = scalar_select 0, %s5, %s3
  // Predicated region
  $region2: #{additive_pulse_train.1} parent=0 // pred_check
    _
  $region3: #{additive_pulse_train.1} parent=0 // pred_check_branch
    %8 = sbr.rel (0) target = $region5
  $region4: #{additive_pulse_train.1} parent=0 // pred_region
    _
  $region5: #{additive_pulse_train.1} parent=0 // pred_fallthru
    _
  // Predicated region
  $region6: #{additive_pulse_train.1} parent=0 // pred_check
    _
  $region7: #{additive_pulse_train.1} parent=0 // pred_check_branch
    %10 = sbr.rel (0) target = $region9
  $region8: #{additive_pulse_train.1} parent=0 // pred_region
    _
  $region9: #{additive_pulse_train.1} parent=0 // pred_fallthru
    _
  %s11 = smul.u32 0, 4
  %s12 = smul.addr %s11, 8
  %s13 = scalar_lea.vmem %s0, %s12
  %v14 = vld [vmem:[%s13] sm:$0xff]
  %v15 = vld [vmem:[%s13 + $0x8] sm:$0xff]
  %v16 = vld [vmem:[%s13 + $0x10] sm:$0xff]
  %v17 = vld [vmem:[%s13 + $0x18] sm:$0xff]
  %s18 = smul.addr %s11, 8
  %s19 = scalar_lea.vmem %s1, %s18
  %v20 = vld [vmem:[%s19] sm:$0xff]
  %v21 = vld [vmem:[%s19 + $0x8] sm:$0xff]
  %v22 = vld [vmem:[%s19 + $0x10] sm:$0xff]
  %v23 = vld [vmem:[%s19 + $0x18] sm:$0xff]
  %v24 = vfloor.f32 %v20
  %v25 = vfloor.f32 %v21
  %v26 = vfloor.f32 %v22
  %v27 = vfloor.f32 %v23
  %v28 = vsub.f32 %v20, %v24
  %v29 = vsub.f32 %v21, %v25
  %v30 = vsub.f32 %v22, %v26
  %v31 = vsub.f32 %v23, %v27
  %v32 = vmul.f32 %v28, 3.1415927
  %v33 = vmul.f32 %v29, 3.1415927
  %v34 = vmul.f32 %v30, 3.1415927
  %v35 = vmul.f32 %v31, 3.1415927
  %v36 = vrcp.pop %v14
  %v37 = vmul.f32 0.5, %v36
  %v38 = vrcp.pop %v15
  %v39 = vmul.f32 0.5, %v38
  %v40 = vrcp.pop %v16
  %v41 = vmul.f32 0.5, %v40
  %v42 = vrcp.pop %v17
  %v43 = vmul.f32 0.5, %v42
  %v44 = vfloor.f32 %v37
  %v45 = vfloor.f32 %v39
  %v46 = vfloor.f32 %v41
  %v47 = vfloor.f32 %v43
  %v48 = vmin.f32 %v44, 155.0
  %v49 = vmin.f32 %v45, 155.0
  %v50 = vmin.f32 %v46, 155.0
  %v51 = vmin.f32 %v47, 155.0
  %v52 = vmul.f32 %v14, %v48
  %v53 = vmul.f32 %v15, %v49
  %v54 = vmul.f32 %v16, %v50
  %v55 = vmul.f32 %v17, %v51
  %vm56 = vcmp.ge.f32.partialorder %v52, 0.5
  %vm57 = vcmp.ge.f32.partialorder %v53, 0.5
  %vm58 = vcmp.ge.f32.partialorder %v54, 0.5
  %vm59 = vcmp.ge.f32.partialorder %v55, 0.5
  %v60 = vsub.f32 %v48, 1.0
  %v61 = vsub.f32 %v49, 1.0
  %v62 = vsub.f32 %v50, 1.0
  %v63 = vsub.f32 %v51, 1.0
  %v64 = vsel %vm56, %v60, %v48
  %v65 = vsel %vm57, %v61, %v49
  %v66 = vsel %vm58, %v62, %v50
  %v67 = vsel %vm59, %v63, %v51
  %vm68 = vcmp.lt.f32.partialorder %v64, 155.0
  %vm69 = vcmp.lt.f32.partialorder %v65, 155.0
  %vm70 = vcmp.lt.f32.partialorder %v66, 155.0
  %vm71 = vcmp.lt.f32.partialorder %v67, 155.0
  %v72 = vadd.f32 %v64, 1.0
  %v73 = vadd.f32 %v65, 1.0
  %v74 = vadd.f32 %v66, 1.0
  %v75 = vadd.f32 %v67, 1.0
  %v76 = vmul.f32 %v14, %v72
  %v77 = vmul.f32 %v15, %v73
  %v78 = vmul.f32 %v16, %v74
  %v79 = vmul.f32 %v17, %v75
  %vm80 = vcmp.lt.f32.partialorder %v76, 0.5
  %vm81 = vcmp.lt.f32.partialorder %v77, 0.5
  %vm82 = vcmp.lt.f32.partialorder %v78, 0.5
  %vm83 = vcmp.lt.f32.partialorder %v79, 0.5
  %vm84 = vmand %vm68, %vm80
  %vm85 = vmand %vm69, %vm81
  %vm86 = vmand %vm70, %vm82
  %vm87 = vmand %vm71, %vm83
  %v88 = vsel %vm84, %v72, %v64
  %v89 = vsel %vm85, %v73, %v65
  %v90 = vsel %vm86, %v74, %v66
  %v91 = vsel %vm87, %v75, %v67
  %v92 = vand.u32 2147483647, %v32
  %vm93 = vcmp.le.f32.partialorder %v92, 0.7853982
  %vm94 = vcmp.lt.s32.totalorder %v32, 0
  %v95 = vand.u32 %v32, 2139095040
  %v96 = vshrl.u32 %v95, 23
  %v97 = vsub.s32 %v96, 127
  %v98 = vand.u32 2147483647, %v32
  %v99 = vand.u32 %v98, 8388607
  %v100 = vor.u32 %v99, 8388608
  %v101 = vsub.s32 0, %v100
  %v102 = vadd.s32 %v97, 1
  %vm103 = vcmp.gt.s32.totalorder %v102, 0
  %v104 = vsel %vm103, %v102, 0
  %v105 = vshrl.u32 %v104, 5
  %v106 = vand.u32 %v104, 31
  %v107 = vsub.s32 32, %v106
  %v108 = vshrl.u32 683565275, %v107
  %v109 = vshll.u32 683565275, %v106
  %v110 = vshrl.u32 2475754826, %v107
  %v111 = vor.u32 %v109, %v110
  %v112 = vshll.u32 2475754826, %v106
  %v113 = vshrl.u32 2131351028, %v107
  %v114 = vor.u32 %v112, %v113
  %v115 = vshll.u32 2131351028, %v106
  %v116 = vshrl.u32 2102212464, %v107
  %v117 = vor.u32 %v115, %v116
  %v118 = vshll.u32 2102212464, %v106
  %v119 = vshrl.u32 920167782, %v107
  %v120 = vor.u32 %v118, %v119
  %v121 = vshll.u32 920167782, %v106
  %v122 = vshrl.u32 1326507024, %v107
  %v123 = vor.u32 %v121, %v122
  %vm124 = vcmp.lt.s32.totalorder %v105, 1
  %vm125 = vcmp.lt.s32.totalorder %v105, 2
  %vm126 = vcmp.lt.s32.totalorder %v105, 3
  %vm127 = vcmp.lt.s32.totalorder %v105, 4
  %v128 = vsel %vm124, %v108, %v111
  %v129 = vsel %vm127, %v117, 2102212464
  %v130 = vsel %vm126, %v114, %v129
  %v131 = vsel %vm125, %v128, %v130
  %v132 = vsel %vm124, %v111, %v114
  %v133 = vsel %vm127, %v120, 920167782
  %v134 = vsel %vm126, %v117, %v133
  %v135 = vsel %vm125, %v132, %v134
  %v136 = vsel %vm124, %v114, %v117
  %v137 = vsel %vm127, %v123, 1326507024
  %v138 = vsel %vm126, %v120, %v137
  %v139 = vsel %vm125, %v136, %v138
  %v140 = vshll.u32 %v100, 8
  %v141 = vmul.u32.u64.compose %v140, %v139
  %v142 = vextract.low.u32 %v141
  %v143 = vextract.high.u32 %v141
  %v144 = vmul.u32.u64.compose %v140, %v135
  %v145 = vextract.low.u32 %v144
  %v146 = vextract.high.u32 %v144
  %v147 = vmul.u32 %v140, %v131
  %v148 = vadd.s32 %v143, %v145
  %vm149 = vc.u32 %v143, %v145
  %v150 = vadd.s32 %v146, 1
  %v151 = vsel %vm149, %v150, %v146
  %v152 = vadd.s32 %v147, %v151
  %v153 = vadd.s32 %v152, 536870912
  %v154 = vshrl.u32 %v153, 30
  %v155 = vshll.u32 %v154, 30
  %v156 = vsub.s32 %v152, %v155
  %vm157 = vcmp.lt.s32.totalorder %v156, 0
  %v158 = vsub.s32 0, %v156
  %v159 = vsel %vm157, %v158, %v156
  %v160 = vclz %v159
  %v161 = vsub.s32 %v160, 2
  %vm162 = vcmp.gt.s32.totalorder 0, %v161
  %v163 = vsel %vm162, 0, %v161
  %v164 = vsub.s32 32, %v163
  %v165 = vshll.u32 %v156, %v163
  %v166 = vshrl.u32 %v148, %v164
  %v167 = vor.u32 %v165, %v166
  %v168 = vsub.s32 4294967266, %v163
  %v169 = vadd.s32 %v168, 127
  %v170 = vshll.u32 %v169, 23
  %v171 = vor.u32 4788187, %v170
  %v172 = vand.u32 2147483647, %v171
  %v174 = vcvt.s32.f32 %v167
  %v175 = vmul.f32 %v174, %v172
  %v176 = vxor.u32 %v175, 2147483648
  %v177 = vsel %vm94, %v176, %v175
  %v178 = vsub.s32 4, %v154
  %v179 = vsel %vm94, %v178, %v154
  %v180 = vsel %vm93, %v32, %v177
  %v181 = vsel %vm93, 0, %v179
  %v182 = vcosq.f32.pop %v180
  %v183 = vsinq.f32.pop %v180
  %vm184 = vweird.f32 %v32
  %v185 = vadd.s32 %v181, 3
  %v186 = vand.u32 %v185, 3
  %vm187 = vcmp.lt.s32.totalorder %v186, 2
  %vm188 = vcmp.eq.s32.totalorder %v186, 0
  %v189 = vxor.u32 %v183, 2147483648
  %v190 = vsel %vm188, %v182, %v189
  %vm191 = vcmp.eq.s32.totalorder %v186, 2
  %v192 = vxor.u32 %v182, 2147483648
  %v193 = vsel %vm191, %v192, %v183
  %v194 = vsel %vm187, %v190, %v193
  %v195 = vsel %vm184, nan, %v194
  %v196 = vand.u32 2147483647, %v33
  %vm197 = vcmp.le.f32.partialorder %v196, 0.7853982
  %vm198 = vcmp.lt.s32.totalorder %v33, 0
  %v199 = vand.u32 %v33, 2139095040
  %v200 = vshrl.u32 %v199, 23
  %v201 = vsub.s32 %v200, 127
  %v202 = vand.u32 2147483647, %v33
  %v203 = vand.u32 %v202, 8388607
  %v204 = vor.u32 %v203, 8388608
  %v205 = vsub.s32 0, %v204
  %v206 = vadd.s32 %v201, 1
  %vm207 = vcmp.gt.s32.totalorder %v206, 0
  %v208 = vsel %vm207, %v206, 0
  %v209 = vshrl.u32 %v208, 5
  %v210 = vand.u32 %v208, 31
  %v211 = vsub.s32 32, %v210
  %v212 = vshrl.u32 683565275, %v211
  %v213 = vshll.u32 683565275, %v210
  %v214 = vshrl.u32 2475754826, %v211
  %v215 = vor.u32 %v213, %v214
  %v216 = vshll.u32 2475754826, %v210
  %v217 = vshrl.u32 2131351028, %v211
  %v218 = vor.u32 %v216, %v217
  %v219 = vshll.u32 2131351028, %v210
  %v220 = vshrl.u32 2102212464, %v211
  %v221 = vor.u32 %v219, %v220
  %v222 = vshll.u32 2102212464, %v210
  %v223 = vshrl.u32 920167782, %v211
  %v224 = vor.u32 %v222, %v223
  %v225 = vshll.u32 920167782, %v210
  %v226 = vshrl.u32 1326507024, %v211
  %v227 = vor.u32 %v225, %v226
  %vm228 = vcmp.lt.s32.totalorder %v209, 1
  %vm229 = vcmp.lt.s32.totalorder %v209, 2
  %vm230 = vcmp.lt.s32.totalorder %v209, 3
  %vm231 = vcmp.lt.s32.totalorder %v209, 4
  %v232 = vsel %vm228, %v212, %v215
  %v233 = vsel %vm231, %v221, 2102212464
  %v234 = vsel %vm230, %v218, %v233
  %v235 = vsel %vm229, %v232, %v234
  %v236 = vsel %vm228, %v215, %v218
  %v237 = vsel %vm231, %v224, 920167782
  %v238 = vsel %vm230, %v221, %v237
  %v239 = vsel %vm229, %v236, %v238
  %v240 = vsel %vm228, %v218, %v221
  %v241 = vsel %vm231, %v227, 1326507024
  %v242 = vsel %vm230, %v224, %v241
  %v243 = vsel %vm229, %v240, %v242
  %v244 = vshll.u32 %v204, 8
  %v245 = vmul.u32.u64.compose %v244, %v243
  %v246 = vextract.low.u32 %v245
  %v247 = vextract.high.u32 %v245
  %v248 = vmul.u32.u64.compose %v244, %v239
  %v249 = vextract.low.u32 %v248
  %v250 = vextract.high.u32 %v248
  %v251 = vmul.u32 %v244, %v235
  %v252 = vadd.s32 %v247, %v249
  %vm253 = vc.u32 %v247, %v249
  %v254 = vadd.s32 %v250, 1
  %v255 = vsel %vm253, %v254, %v250
  %v256 = vadd.s32 %v251, %v255
  %v257 = vadd.s32 %v256, 536870912
  %v258 = vshrl.u32 %v257, 30
  %v259 = vshll.u32 %v258, 30
  %v260 = vsub.s32 %v256, %v259
  %vm261 = vcmp.lt.s32.totalorder %v260, 0
  %v262 = vsub.s32 0, %v260
  %v263 = vsel %vm261, %v262, %v260
  %v264 = vclz %v263
  %v265 = vsub.s32 %v264, 2
  %vm266 = vcmp.gt.s32.totalorder 0, %v265
  %v267 = vsel %vm266, 0, %v265
  %v268 = vsub.s32 32, %v267
  %v269 = vshll.u32 %v260, %v267
  %v270 = vshrl.u32 %v252, %v268
  %v271 = vor.u32 %v269, %v270
  %v272 = vsub.s32 4294967266, %v267
  %v273 = vadd.s32 %v272, 127
  %v274 = vshll.u32 %v273, 23
  %v275 = vor.u32 4788187, %v274
  %v276 = vand.u32 2147483647, %v275
  %v278 = vcvt.s32.f32 %v271
  %v279 = vmul.f32 %v278, %v276
  %v280 = vxor.u32 %v279, 2147483648
  %v281 = vsel %vm198, %v280, %v279
  %v282 = vsub.s32 4, %v258
  %v283 = vsel %vm198, %v282, %v258
  %v284 = vsel %vm197, %v33, %v281
  %v285 = vsel %vm197, 0, %v283
  %v286 = vcosq.f32.pop %v284
  %v287 = vsinq.f32.pop %v284
  %vm288 = vweird.f32 %v33
  %v289 = vadd.s32 %v285, 3
  %v290 = vand.u32 %v289, 3
  %vm291 = vcmp.lt.s32.totalorder %v290, 2
  %vm292 = vcmp.eq.s32.totalorder %v290, 0
  %v293 = vxor.u32 %v287, 2147483648
  %v294 = vsel %vm292, %v286, %v293
  %vm295 = vcmp.eq.s32.totalorder %v290, 2
  %v296 = vxor.u32 %v286, 2147483648
  %v297 = vsel %vm295, %v296, %v287
  %v298 = vsel %vm291, %v294, %v297
  %v299 = vsel %vm288, nan, %v298
  %v300 = vand.u32 2147483647, %v34
  %vm301 = vcmp.le.f32.partialorder %v300, 0.7853982
  %vm302 = vcmp.lt.s32.totalorder %v34, 0
  %v303 = vand.u32 %v34, 2139095040
  %v304 = vshrl.u32 %v303, 23
  %v305 = vsub.s32 %v304, 127
  %v306 = vand.u32 2147483647, %v34
  %v307 = vand.u32 %v306, 8388607
  %v308 = vor.u32 %v307, 8388608
  %v309 = vsub.s32 0, %v308
  %v310 = vadd.s32 %v305, 1
  %vm311 = vcmp.gt.s32.totalorder %v310, 0
  %v312 = vsel %vm311, %v310, 0
  %v313 = vshrl.u32 %v312, 5
  %v314 = vand.u32 %v312, 31
  %v315 = vsub.s32 32, %v314
  %v316 = vshrl.u32 683565275, %v315
  %v317 = vshll.u32 683565275, %v314
  %v318 = vshrl.u32 2475754826, %v315
  %v319 = vor.u32 %v317, %v318
  %v320 = vshll.u32 2475754826, %v314
  %v321 = vshrl.u32 2131351028, %v315
  %v322 = vor.u32 %v320, %v321
  %v323 = vshll.u32 2131351028, %v314
  %v324 = vshrl.u32 2102212464, %v315
  %v325 = vor.u32 %v323, %v324
  %v326 = vshll.u32 2102212464, %v314
  %v327 = vshrl.u32 920167782, %v315
  %v328 = vor.u32 %v326, %v327
  %v329 = vshll.u32 920167782, %v314
  %v330 = vshrl.u32 1326507024, %v315
  %v331 = vor.u32 %v329, %v330
  %vm332 = vcmp.lt.s32.totalorder %v313, 1
  %vm333 = vcmp.lt.s32.totalorder %v313, 2
  %vm334 = vcmp.lt.s32.totalorder %v313, 3
  %vm335 = vcmp.lt.s32.totalorder %v313, 4
  %v336 = vsel %vm332, %v316, %v319
  %v337 = vsel %vm335, %v325, 2102212464
  %v338 = vsel %vm334, %v322, %v337
  %v339 = vsel %vm333, %v336, %v338
  %v340 = vsel %vm332, %v319, %v322
  %v341 = vsel %vm335, %v328, 920167782
  %v342 = vsel %vm334, %v325, %v341
  %v343 = vsel %vm333, %v340, %v342
  %v344 = vsel %vm332, %v322, %v325
  %v345 = vsel %vm335, %v331, 1326507024
  %v346 = vsel %vm334, %v328, %v345
  %v347 = vsel %vm333, %v344, %v346
  %v348 = vshll.u32 %v308, 8
  %v349 = vmul.u32.u64.compose %v348, %v347
  %v350 = vextract.low.u32 %v349
  %v351 = vextract.high.u32 %v349
  %v352 = vmul.u32.u64.compose %v348, %v343
  %v353 = vextract.low.u32 %v352
  %v354 = vextract.high.u32 %v352
  %v355 = vmul.u32 %v348, %v339
  %v356 = vadd.s32 %v351, %v353
  %vm357 = vc.u32 %v351, %v353
  %v358 = vadd.s32 %v354, 1
  %v359 = vsel %vm357, %v358, %v354
  %v360 = vadd.s32 %v355, %v359
  %v361 = vadd.s32 %v360, 536870912
  %v362 = vshrl.u32 %v361, 30
  %v363 = vshll.u32 %v362, 30
  %v364 = vsub.s32 %v360, %v363
  %vm365 = vcmp.lt.s32.totalorder %v364, 0
  %v366 = vsub.s32 0, %v364
  %v367 = vsel %vm365, %v366, %v364
  %v368 = vclz %v367
  %v369 = vsub.s32 %v368, 2
  %vm370 = vcmp.gt.s32.totalorder 0, %v369
  %v371 = vsel %vm370, 0, %v369
  %v372 = vsub.s32 32, %v371
  %v373 = vshll.u32 %v364, %v371
  %v374 = vshrl.u32 %v356, %v372
  %v375 = vor.u32 %v373, %v374
  %v376 = vsub.s32 4294967266, %v371
  %v377 = vadd.s32 %v376, 127
  %v378 = vshll.u32 %v377, 23
  %v379 = vor.u32 4788187, %v378
  %v380 = vand.u32 2147483647, %v379
  %v382 = vcvt.s32.f32 %v375
  %v383 = vmul.f32 %v382, %v380
  %v384 = vxor.u32 %v383, 2147483648
  %v385 = vsel %vm302, %v384, %v383
  %v386 = vsub.s32 4, %v362
  %v387 = vsel %vm302, %v386, %v362
  %v388 = vsel %vm301, %v34, %v385
  %v389 = vsel %vm301, 0, %v387
  %v390 = vcosq.f32.pop %v388
  %v391 = vsinq.f32.pop %v388
  %vm392 = vweird.f32 %v34
  %v393 = vadd.s32 %v389, 3
  %v394 = vand.u32 %v393, 3
  %vm395 = vcmp.lt.s32.totalorder %v394, 2
  %vm396 = vcmp.eq.s32.totalorder %v394, 0
  %v397 = vxor.u32 %v391, 2147483648
  %v398 = vsel %vm396, %v390, %v397
  %vm399 = vcmp.eq.s32.totalorder %v394, 2
  %v400 = vxor.u32 %v390, 2147483648
  %v401 = vsel %vm399, %v400, %v391
  %v402 = vsel %vm395, %v398, %v401
  %v403 = vsel %vm392, nan, %v402
  %v404 = vand.u32 2147483647, %v35
  %vm405 = vcmp.le.f32.partialorder %v404, 0.7853982
  %vm406 = vcmp.lt.s32.totalorder %v35, 0
  %v407 = vand.u32 %v35, 2139095040
  %v408 = vshrl.u32 %v407, 23
  %v409 = vsub.s32 %v408, 127
  %v410 = vand.u32 2147483647, %v35
  %v411 = vand.u32 %v410, 8388607
  %v412 = vor.u32 %v411, 8388608
  %v413 = vsub.s32 0, %v412
  %v414 = vadd.s32 %v409, 1
  %vm415 = vcmp.gt.s32.totalorder %v414, 0
  %v416 = vsel %vm415, %v414, 0
  %v417 = vshrl.u32 %v416, 5
  %v418 = vand.u32 %v416, 31
  %v419 = vsub.s32 32, %v418
  %v420 = vshrl.u32 683565275, %v419
  %v421 = vshll.u32 683565275, %v418
  %v422 = vshrl.u32 2475754826, %v419
  %v423 = vor.u32 %v421, %v422
  %v424 = vshll.u32 2475754826, %v418
  %v425 = vshrl.u32 2131351028, %v419
  %v426 = vor.u32 %v424, %v425
  %v427 = vshll.u32 2131351028, %v418
  %v428 = vshrl.u32 2102212464, %v419
  %v429 = vor.u32 %v427, %v428
  %v430 = vshll.u32 2102212464, %v418
  %v431 = vshrl.u32 920167782, %v419
  %v432 = vor.u32 %v430, %v431
  %v433 = vshll.u32 920167782, %v418
  %v434 = vshrl.u32 1326507024, %v419
  %v435 = vor.u32 %v433, %v434
  %vm436 = vcmp.lt.s32.totalorder %v417, 1
  %vm437 = vcmp.lt.s32.totalorder %v417, 2
  %vm438 = vcmp.lt.s32.totalorder %v417, 3
  %vm439 = vcmp.lt.s32.totalorder %v417, 4
  %v440 = vsel %vm436, %v420, %v423
  %v441 = vsel %vm439, %v429, 2102212464
  %v442 = vsel %vm438, %v426, %v441
  %v443 = vsel %vm437, %v440, %v442
  %v444 = vsel %vm436, %v423, %v426
  %v445 = vsel %vm439, %v432, 920167782
  %v446 = vsel %vm438, %v429, %v445
  %v447 = vsel %vm437, %v444, %v446
  %v448 = vsel %vm436, %v426, %v429
  %v449 = vsel %vm439, %v435, 1326507024
  %v450 = vsel %vm438, %v432, %v449
  %v451 = vsel %vm437, %v448, %v450
  %v452 = vshll.u32 %v412, 8
  %v453 = vmul.u32.u64.compose %v452, %v451
  %v454 = vextract.low.u32 %v453
  %v455 = vextract.high.u32 %v453
  %v456 = vmul.u32.u64.compose %v452, %v447
  %v457 = vextract.low.u32 %v456
  %v458 = vextract.high.u32 %v456
  %v459 = vmul.u32 %v452, %v443
  %v460 = vadd.s32 %v455, %v457
  %vm461 = vc.u32 %v455, %v457
  %v462 = vadd.s32 %v458, 1
  %v463 = vsel %vm461, %v462, %v458
  %v464 = vadd.s32 %v459, %v463
  %v465 = vadd.s32 %v464, 536870912
  %v466 = vshrl.u32 %v465, 30
  %v467 = vshll.u32 %v466, 30
  %v468 = vsub.s32 %v464, %v467
  %vm469 = vcmp.lt.s32.totalorder %v468, 0
  %v470 = vsub.s32 0, %v468
  %v471 = vsel %vm469, %v470, %v468
  %v472 = vclz %v471
  %v473 = vsub.s32 %v472, 2
  %vm474 = vcmp.gt.s32.totalorder 0, %v473
  %v475 = vsel %vm474, 0, %v473
  %v476 = vsub.s32 32, %v475
  %v477 = vshll.u32 %v468, %v475
  %v478 = vshrl.u32 %v460, %v476
  %v479 = vor.u32 %v477, %v478
  %v480 = vsub.s32 4294967266, %v475
  %v481 = vadd.s32 %v480, 127
  %v482 = vshll.u32 %v481, 23
  %v483 = vor.u32 4788187, %v482
  %v484 = vand.u32 2147483647, %v483
  %v486 = vcvt.s32.f32 %v479
  %v487 = vmul.f32 %v486, %v484
  %v488 = vxor.u32 %v487, 2147483648
  %v489 = vsel %vm406, %v488, %v487
  %v490 = vsub.s32 4, %v466
  %v491 = vsel %vm406, %v490, %v466
  %v492 = vsel %vm405, %v35, %v489
  %v493 = vsel %vm405, 0, %v491
  %v494 = vcosq.f32.pop %v492
  %v495 = vsinq.f32.pop %v492
  %vm496 = vweird.f32 %v35
  %v497 = vadd.s32 %v493, 3
  %v498 = vand.u32 %v497, 3
  %vm499 = vcmp.lt.s32.totalorder %v498, 2
  %vm500 = vcmp.eq.s32.totalorder %v498, 0
  %v501 = vxor.u32 %v495, 2147483648
  %v502 = vsel %vm500, %v494, %v501
  %vm503 = vcmp.eq.s32.totalorder %v498, 2
  %v504 = vxor.u32 %v494, 2147483648
  %v505 = vsel %vm503, %v504, %v495
  %v506 = vsel %vm499, %v502, %v505
  %v507 = vsel %vm496, nan, %v506
  %v508 = vmul.f32 %v88, %v32
  %v509 = vmul.f32 %v89, %v33
  %v510 = vmul.f32 %v90, %v34
  %v511 = vmul.f32 %v91, %v35
  %v512 = vand.u32 2147483647, %v508
  %vm513 = vcmp.le.f32.partialorder %v512, 0.7853982
  %vm514 = vcmp.lt.s32.totalorder %v508, 0
  %v515 = vand.u32 %v508, 2139095040
  %v516 = vshrl.u32 %v515, 23
  %v517 = vsub.s32 %v516, 127
  %v518 = vand.u32 2147483647, %v508
  %v519 = vand.u32 %v518, 8388607
  %v520 = vor.u32 %v519, 8388608
  %v521 = vsub.s32 0, %v520
  %v522 = vadd.s32 %v517, 1
  %vm523 = vcmp.gt.s32.totalorder %v522, 0
  %v524 = vsel %vm523, %v522, 0
  %v525 = vshrl.u32 %v524, 5
  %v526 = vand.u32 %v524, 31
  %v527 = vsub.s32 32, %v526
  %v528 = vshrl.u32 683565275, %v527
  %v529 = vshll.u32 683565275, %v526
  %v530 = vshrl.u32 2475754826, %v527
  %v531 = vor.u32 %v529, %v530
  %v532 = vshll.u32 2475754826, %v526
  %v533 = vshrl.u32 2131351028, %v527
  %v534 = vor.u32 %v532, %v533
  %v535 = vshll.u32 2131351028, %v526
  %v536 = vshrl.u32 2102212464, %v527
  %v537 = vor.u32 %v535, %v536
  %v538 = vshll.u32 2102212464, %v526
  %v539 = vshrl.u32 920167782, %v527
  %v540 = vor.u32 %v538, %v539
  %v541 = vshll.u32 920167782, %v526
  %v542 = vshrl.u32 1326507024, %v527
  %v543 = vor.u32 %v541, %v542
  %vm544 = vcmp.lt.s32.totalorder %v525, 1
  %vm545 = vcmp.lt.s32.totalorder %v525, 2
  %vm546 = vcmp.lt.s32.totalorder %v525, 3
  %vm547 = vcmp.lt.s32.totalorder %v525, 4
  %v548 = vsel %vm544, %v528, %v531
  %v549 = vsel %vm547, %v537, 2102212464
  %v550 = vsel %vm546, %v534, %v549
  %v551 = vsel %vm545, %v548, %v550
  %v552 = vsel %vm544, %v531, %v534
  %v553 = vsel %vm547, %v540, 920167782
  %v554 = vsel %vm546, %v537, %v553
  %v555 = vsel %vm545, %v552, %v554
  %v556 = vsel %vm544, %v534, %v537
  %v557 = vsel %vm547, %v543, 1326507024
  %v558 = vsel %vm546, %v540, %v557
  %v559 = vsel %vm545, %v556, %v558
  %v560 = vshll.u32 %v520, 8
  %v561 = vmul.u32.u64.compose %v560, %v559
  %v562 = vextract.low.u32 %v561
  %v563 = vextract.high.u32 %v561
  %v564 = vmul.u32.u64.compose %v560, %v555
  %v565 = vextract.low.u32 %v564
  %v566 = vextract.high.u32 %v564
  %v567 = vmul.u32 %v560, %v551
  %v568 = vadd.s32 %v563, %v565
  %vm569 = vc.u32 %v563, %v565
  %v570 = vadd.s32 %v566, 1
  %v571 = vsel %vm569, %v570, %v566
  %v572 = vadd.s32 %v567, %v571
  %v573 = vadd.s32 %v572, 536870912
  %v574 = vshrl.u32 %v573, 30
  %v575 = vshll.u32 %v574, 30
  %v576 = vsub.s32 %v572, %v575
  %vm577 = vcmp.lt.s32.totalorder %v576, 0
  %v578 = vsub.s32 0, %v576
  %v579 = vsel %vm577, %v578, %v576
  %v580 = vclz %v579
  %v581 = vsub.s32 %v580, 2
  %vm582 = vcmp.gt.s32.totalorder 0, %v581
  %v583 = vsel %vm582, 0, %v581
  %v584 = vsub.s32 32, %v583
  %v585 = vshll.u32 %v576, %v583
  %v586 = vshrl.u32 %v568, %v584
  %v587 = vor.u32 %v585, %v586
  %v588 = vsub.s32 4294967266, %v583
  %v589 = vadd.s32 %v588, 127
  %v590 = vshll.u32 %v589, 23
  %v591 = vor.u32 4788187, %v590
  %v592 = vand.u32 2147483647, %v591
  %v594 = vcvt.s32.f32 %v587
  %v595 = vmul.f32 %v594, %v592
  %v596 = vxor.u32 %v595, 2147483648
  %v597 = vsel %vm514, %v596, %v595
  %v598 = vsub.s32 4, %v574
  %v599 = vsel %vm514, %v598, %v574
  %v600 = vsel %vm513, %v508, %v597
  %v601 = vsel %vm513, 0, %v599
  %v602 = vcosq.f32.pop %v600
  %v603 = vsinq.f32.pop %v600
  %vm604 = vweird.f32 %v508
  %v605 = vadd.s32 %v601, 3
  %v606 = vand.u32 %v605, 3
  %vm607 = vcmp.lt.s32.totalorder %v606, 2
  %vm608 = vcmp.eq.s32.totalorder %v606, 0
  %v609 = vxor.u32 %v603, 2147483648
  %v610 = vsel %vm608, %v602, %v609
  %vm611 = vcmp.eq.s32.totalorder %v606, 2
  %v612 = vxor.u32 %v602, 2147483648
  %v613 = vsel %vm611, %v612, %v603
  %v614 = vsel %vm607, %v610, %v613
  %v615 = vsel %vm604, nan, %v614
  %v616 = vand.u32 2147483647, %v509
  %vm617 = vcmp.le.f32.partialorder %v616, 0.7853982
  %vm618 = vcmp.lt.s32.totalorder %v509, 0
  %v619 = vand.u32 %v509, 2139095040
  %v620 = vshrl.u32 %v619, 23
  %v621 = vsub.s32 %v620, 127
  %v622 = vand.u32 2147483647, %v509
  %v623 = vand.u32 %v622, 8388607
  %v624 = vor.u32 %v623, 8388608
  %v625 = vsub.s32 0, %v624
  %v626 = vadd.s32 %v621, 1
  %vm627 = vcmp.gt.s32.totalorder %v626, 0
  %v628 = vsel %vm627, %v626, 0
  %v629 = vshrl.u32 %v628, 5
  %v630 = vand.u32 %v628, 31
  %v631 = vsub.s32 32, %v630
  %v632 = vshrl.u32 683565275, %v631
  %v633 = vshll.u32 683565275, %v630
  %v634 = vshrl.u32 2475754826, %v631
  %v635 = vor.u32 %v633, %v634
  %v636 = vshll.u32 2475754826, %v630
  %v637 = vshrl.u32 2131351028, %v631
  %v638 = vor.u32 %v636, %v637
  %v639 = vshll.u32 2131351028, %v630
  %v640 = vshrl.u32 2102212464, %v631
  %v641 = vor.u32 %v639, %v640
  %v642 = vshll.u32 2102212464, %v630
  %v643 = vshrl.u32 920167782, %v631
  %v644 = vor.u32 %v642, %v643
  %v645 = vshll.u32 920167782, %v630
  %v646 = vshrl.u32 1326507024, %v631
  %v647 = vor.u32 %v645, %v646
  %vm648 = vcmp.lt.s32.totalorder %v629, 1
  %vm649 = vcmp.lt.s32.totalorder %v629, 2
  %vm650 = vcmp.lt.s32.totalorder %v629, 3
  %vm651 = vcmp.lt.s32.totalorder %v629, 4
  %v652 = vsel %vm648, %v632, %v635
  %v653 = vsel %vm651, %v641, 2102212464
  %v654 = vsel %vm650, %v638, %v653
  %v655 = vsel %vm649, %v652, %v654
  %v656 = vsel %vm648, %v635, %v638
  %v657 = vsel %vm651, %v644, 920167782
  %v658 = vsel %vm650, %v641, %v657
  %v659 = vsel %vm649, %v656, %v658
  %v660 = vsel %vm648, %v638, %v641
  %v661 = vsel %vm651, %v647, 1326507024
  %v662 = vsel %vm650, %v644, %v661
  %v663 = vsel %vm649, %v660, %v662
  %v664 = vshll.u32 %v624, 8
  %v665 = vmul.u32.u64.compose %v664, %v663
  %v666 = vextract.low.u32 %v665
  %v667 = vextract.high.u32 %v665
  %v668 = vmul.u32.u64.compose %v664, %v659
  %v669 = vextract.low.u32 %v668
  %v670 = vextract.high.u32 %v668
  %v671 = vmul.u32 %v664, %v655
  %v672 = vadd.s32 %v667, %v669
  %vm673 = vc.u32 %v667, %v669
  %v674 = vadd.s32 %v670, 1
  %v675 = vsel %vm673, %v674, %v670
  %v676 = vadd.s32 %v671, %v675
  %v677 = vadd.s32 %v676, 536870912
  %v678 = vshrl.u32 %v677, 30
  %v679 = vshll.u32 %v678, 30
  %v680 = vsub.s32 %v676, %v679
  %vm681 = vcmp.lt.s32.totalorder %v680, 0
  %v682 = vsub.s32 0, %v680
  %v683 = vsel %vm681, %v682, %v680
  %v684 = vclz %v683
  %v685 = vsub.s32 %v684, 2
  %vm686 = vcmp.gt.s32.totalorder 0, %v685
  %v687 = vsel %vm686, 0, %v685
  %v688 = vsub.s32 32, %v687
  %v689 = vshll.u32 %v680, %v687
  %v690 = vshrl.u32 %v672, %v688
  %v691 = vor.u32 %v689, %v690
  %v692 = vsub.s32 4294967266, %v687
  %v693 = vadd.s32 %v692, 127
  %v694 = vshll.u32 %v693, 23
  %v695 = vor.u32 4788187, %v694
  %v696 = vand.u32 2147483647, %v695
  %v698 = vcvt.s32.f32 %v691
  %v699 = vmul.f32 %v698, %v696
  %v700 = vxor.u32 %v699, 2147483648
  %v701 = vsel %vm618, %v700, %v699
  %v702 = vsub.s32 4, %v678
  %v703 = vsel %vm618, %v702, %v678
  %v704 = vsel %vm617, %v509, %v701
  %v705 = vsel %vm617, 0, %v703
  %v706 = vcosq.f32.pop %v704
  %v707 = vsinq.f32.pop %v704
  %vm708 = vweird.f32 %v509
  %v709 = vadd.s32 %v705, 3
  %v710 = vand.u32 %v709, 3
  %vm711 = vcmp.lt.s32.totalorder %v710, 2
  %vm712 = vcmp.eq.s32.totalorder %v710, 0
  %v713 = vxor.u32 %v707, 2147483648
  %v714 = vsel %vm712, %v706, %v713
  %vm715 = vcmp.eq.s32.totalorder %v710, 2
  %v716 = vxor.u32 %v706, 2147483648
  %v717 = vsel %vm715, %v716, %v707
  %v718 = vsel %vm711, %v714, %v717
  %v719 = vsel %vm708, nan, %v718
  %v720 = vand.u32 2147483647, %v510
  %vm721 = vcmp.le.f32.partialorder %v720, 0.7853982
  %vm722 = vcmp.lt.s32.totalorder %v510, 0
  %v723 = vand.u32 %v510, 2139095040
  %v724 = vshrl.u32 %v723, 23
  %v725 = vsub.s32 %v724, 127
  %v726 = vand.u32 2147483647, %v510
  %v727 = vand.u32 %v726, 8388607
  %v728 = vor.u32 %v727, 8388608
  %v729 = vsub.s32 0, %v728
  %v730 = vadd.s32 %v725, 1
  %vm731 = vcmp.gt.s32.totalorder %v730, 0
  %v732 = vsel %vm731, %v730, 0
  %v733 = vshrl.u32 %v732, 5
  %v734 = vand.u32 %v732, 31
  %v735 = vsub.s32 32, %v734
  %v736 = vshrl.u32 683565275, %v735
  %v737 = vshll.u32 683565275, %v734
  %v738 = vshrl.u32 2475754826, %v735
  %v739 = vor.u32 %v737, %v738
  %v740 = vshll.u32 2475754826, %v734
  %v741 = vshrl.u32 2131351028, %v735
  %v742 = vor.u32 %v740, %v741
  %v743 = vshll.u32 2131351028, %v734
  %v744 = vshrl.u32 2102212464, %v735
  %v745 = vor.u32 %v743, %v744
  %v746 = vshll.u32 2102212464, %v734
  %v747 = vshrl.u32 920167782, %v735
  %v748 = vor.u32 %v746, %v747
  %v749 = vshll.u32 920167782, %v734
  %v750 = vshrl.u32 1326507024, %v735
  %v751 = vor.u32 %v749, %v750
  %vm752 = vcmp.lt.s32.totalorder %v733, 1
  %vm753 = vcmp.lt.s32.totalorder %v733, 2
  %vm754 = vcmp.lt.s32.totalorder %v733, 3
  %vm755 = vcmp.lt.s32.totalorder %v733, 4
  %v756 = vsel %vm752, %v736, %v739
  %v757 = vsel %vm755, %v745, 2102212464
  %v758 = vsel %vm754, %v742, %v757
  %v759 = vsel %vm753, %v756, %v758
  %v760 = vsel %vm752, %v739, %v742
  %v761 = vsel %vm755, %v748, 920167782
  %v762 = vsel %vm754, %v745, %v761
  %v763 = vsel %vm753, %v760, %v762
  %v764 = vsel %vm752, %v742, %v745
  %v765 = vsel %vm755, %v751, 1326507024
  %v766 = vsel %vm754, %v748, %v765
  %v767 = vsel %vm753, %v764, %v766
  %v768 = vshll.u32 %v728, 8
  %v769 = vmul.u32.u64.compose %v768, %v767
  %v770 = vextract.low.u32 %v769
  %v771 = vextract.high.u32 %v769
  %v772 = vmul.u32.u64.compose %v768, %v763
  %v773 = vextract.low.u32 %v772
  %v774 = vextract.high.u32 %v772
  %v775 = vmul.u32 %v768, %v759
  %v776 = vadd.s32 %v771, %v773
  %vm777 = vc.u32 %v771, %v773
  %v778 = vadd.s32 %v774, 1
  %v779 = vsel %vm777, %v778, %v774
  %v780 = vadd.s32 %v775, %v779
  %v781 = vadd.s32 %v780, 536870912
  %v782 = vshrl.u32 %v781, 30
  %v783 = vshll.u32 %v782, 30
  %v784 = vsub.s32 %v780, %v783
  %vm785 = vcmp.lt.s32.totalorder %v784, 0
  %v786 = vsub.s32 0, %v784
  %v787 = vsel %vm785, %v786, %v784
  %v788 = vclz %v787
  %v789 = vsub.s32 %v788, 2
  %vm790 = vcmp.gt.s32.totalorder 0, %v789
  %v791 = vsel %vm790, 0, %v789
  %v792 = vsub.s32 32, %v791
  %v793 = vshll.u32 %v784, %v791
  %v794 = vshrl.u32 %v776, %v792
  %v795 = vor.u32 %v793, %v794
  %v796 = vsub.s32 4294967266, %v791
  %v797 = vadd.s32 %v796, 127
  %v798 = vshll.u32 %v797, 23
  %v799 = vor.u32 4788187, %v798
  %v800 = vand.u32 2147483647, %v799
  %v802 = vcvt.s32.f32 %v795
  %v803 = vmul.f32 %v802, %v800
  %v804 = vxor.u32 %v803, 2147483648
  %v805 = vsel %vm722, %v804, %v803
  %v806 = vsub.s32 4, %v782
  %v807 = vsel %vm722, %v806, %v782
  %v808 = vsel %vm721, %v510, %v805
  %v809 = vsel %vm721, 0, %v807
  %v810 = vcosq.f32.pop %v808
  %v811 = vsinq.f32.pop %v808
  %vm812 = vweird.f32 %v510
  %v813 = vadd.s32 %v809, 3
  %v814 = vand.u32 %v813, 3
  %vm815 = vcmp.lt.s32.totalorder %v814, 2
  %vm816 = vcmp.eq.s32.totalorder %v814, 0
  %v817 = vxor.u32 %v811, 2147483648
  %v818 = vsel %vm816, %v810, %v817
  %vm819 = vcmp.eq.s32.totalorder %v814, 2
  %v820 = vxor.u32 %v810, 2147483648
  %v821 = vsel %vm819, %v820, %v811
  %v822 = vsel %vm815, %v818, %v821
  %v823 = vsel %vm812, nan, %v822
  %v824 = vand.u32 2147483647, %v511
  %vm825 = vcmp.le.f32.partialorder %v824, 0.7853982
  %vm826 = vcmp.lt.s32.totalorder %v511, 0
  %v827 = vand.u32 %v511, 2139095040
  %v828 = vshrl.u32 %v827, 23
  %v829 = vsub.s32 %v828, 127
  %v830 = vand.u32 2147483647, %v511
  %v831 = vand.u32 %v830, 8388607
  %v832 = vor.u32 %v831, 8388608
  %v833 = vsub.s32 0, %v832
  %v834 = vadd.s32 %v829, 1
  %vm835 = vcmp.gt.s32.totalorder %v834, 0
  %v836 = vsel %vm835, %v834, 0
  %v837 = vshrl.u32 %v836, 5
  %v838 = vand.u32 %v836, 31
  %v839 = vsub.s32 32, %v838
  %v840 = vshrl.u32 683565275, %v839
  %v841 = vshll.u32 683565275, %v838
  %v842 = vshrl.u32 2475754826, %v839
  %v843 = vor.u32 %v841, %v842
  %v844 = vshll.u32 2475754826, %v838
  %v845 = vshrl.u32 2131351028, %v839
  %v846 = vor.u32 %v844, %v845
  %v847 = vshll.u32 2131351028, %v838
  %v848 = vshrl.u32 2102212464, %v839
  %v849 = vor.u32 %v847, %v848
  %v850 = vshll.u32 2102212464, %v838
  %v851 = vshrl.u32 920167782, %v839
  %v852 = vor.u32 %v850, %v851
  %v853 = vshll.u32 920167782, %v838
  %v854 = vshrl.u32 1326507024, %v839
  %v855 = vor.u32 %v853, %v854
  %vm856 = vcmp.lt.s32.totalorder %v837, 1
  %vm857 = vcmp.lt.s32.totalorder %v837, 2
  %vm858 = vcmp.lt.s32.totalorder %v837, 3
  %vm859 = vcmp.lt.s32.totalorder %v837, 4
  %v860 = vsel %vm856, %v840, %v843
  %v861 = vsel %vm859, %v849, 2102212464
  %v862 = vsel %vm858, %v846, %v861
  %v863 = vsel %vm857, %v860, %v862
  %v864 = vsel %vm856, %v843, %v846
  %v865 = vsel %vm859, %v852, 920167782
  %v866 = vsel %vm858, %v849, %v865
  %v867 = vsel %vm857, %v864, %v866
  %v868 = vsel %vm856, %v846, %v849
  %v869 = vsel %vm859, %v855, 1326507024
  %v870 = vsel %vm858, %v852, %v869
  %v871 = vsel %vm857, %v868, %v870
  %v872 = vshll.u32 %v832, 8
  %v873 = vmul.u32.u64.compose %v872, %v871
  %v874 = vextract.low.u32 %v873
  %v875 = vextract.high.u32 %v873
  %v876 = vmul.u32.u64.compose %v872, %v867
  %v877 = vextract.low.u32 %v876
  %v878 = vextract.high.u32 %v876
  %v879 = vmul.u32 %v872, %v863
  %v880 = vadd.s32 %v875, %v877
  %vm881 = vc.u32 %v875, %v877
  %v882 = vadd.s32 %v878, 1
  %v883 = vsel %vm881, %v882, %v878
  %v884 = vadd.s32 %v879, %v883
  %v885 = vadd.s32 %v884, 536870912
  %v886 = vshrl.u32 %v885, 30
  %v887 = vshll.u32 %v886, 30
  %v888 = vsub.s32 %v884, %v887
  %vm889 = vcmp.lt.s32.totalorder %v888, 0
  %v890 = vsub.s32 0, %v888
  %v891 = vsel %vm889, %v890, %v888
  %v892 = vclz %v891
  %v893 = vsub.s32 %v892, 2
  %vm894 = vcmp.gt.s32.totalorder 0, %v893
  %v895 = vsel %vm894, 0, %v893
  %v896 = vsub.s32 32, %v895
  %v897 = vshll.u32 %v888, %v895
  %v898 = vshrl.u32 %v880, %v896
  %v899 = vor.u32 %v897, %v898
  %v900 = vsub.s32 4294967266, %v895
  %v901 = vadd.s32 %v900, 127
  %v902 = vshll.u32 %v901, 23
  %v903 = vor.u32 4788187, %v902
  %v904 = vand.u32 2147483647, %v903
  %v906 = vcvt.s32.f32 %v899
  %v907 = vmul.f32 %v906, %v904
  %v908 = vxor.u32 %v907, 2147483648
  %v909 = vsel %vm826, %v908, %v907
  %v910 = vsub.s32 4, %v886
  %v911 = vsel %vm826, %v910, %v886
  %v912 = vsel %vm825, %v511, %v909
  %v913 = vsel %vm825, 0, %v911
  %v914 = vcosq.f32.pop %v912
  %v915 = vsinq.f32.pop %v912
  %vm916 = vweird.f32 %v511
  %v917 = vadd.s32 %v913, 3
  %v918 = vand.u32 %v917, 3
  %vm919 = vcmp.lt.s32.totalorder %v918, 2
  %vm920 = vcmp.eq.s32.totalorder %v918, 0
  %v921 = vxor.u32 %v915, 2147483648
  %v922 = vsel %vm920, %v914, %v921
  %vm923 = vcmp.eq.s32.totalorder %v918, 2
  %v924 = vxor.u32 %v914, 2147483648
  %v925 = vsel %vm923, %v924, %v915
  %v926 = vsel %vm919, %v922, %v925
  %v927 = vsel %vm916, nan, %v926
  %v928 = vadd.f32 %v88, 1.0
  %v929 = vadd.f32 %v89, 1.0
  %v930 = vadd.f32 %v90, 1.0
  %v931 = vadd.f32 %v91, 1.0
  %v932 = vmul.f32 %v928, %v32
  %v933 = vmul.f32 %v929, %v33
  %v934 = vmul.f32 %v930, %v34
  %v935 = vmul.f32 %v931, %v35
  %v936 = vand.u32 2147483647, %v932
  %vm937 = vcmp.le.f32.partialorder %v936, 0.7853982
  %vm938 = vcmp.lt.s32.totalorder %v932, 0
  %v939 = vand.u32 %v932, 2139095040
  %v940 = vshrl.u32 %v939, 23
  %v941 = vsub.s32 %v940, 127
  %v942 = vand.u32 2147483647, %v932
  %v943 = vand.u32 %v942, 8388607
  %v944 = vor.u32 %v943, 8388608
  %v945 = vsub.s32 0, %v944
  %v946 = vadd.s32 %v941, 1
  %vm947 = vcmp.gt.s32.totalorder %v946, 0
  %v948 = vsel %vm947, %v946, 0
  %v949 = vshrl.u32 %v948, 5
  %v950 = vand.u32 %v948, 31
  %v951 = vsub.s32 32, %v950
  %v952 = vshrl.u32 683565275, %v951
  %v953 = vshll.u32 683565275, %v950
  %v954 = vshrl.u32 2475754826, %v951
  %v955 = vor.u32 %v953, %v954
  %v956 = vshll.u32 2475754826, %v950
  %v957 = vshrl.u32 2131351028, %v951
  %v958 = vor.u32 %v956, %v957
  %v959 = vshll.u32 2131351028, %v950
  %v960 = vshrl.u32 2102212464, %v951
  %v961 = vor.u32 %v959, %v960
  %v962 = vshll.u32 2102212464, %v950
  %v963 = vshrl.u32 920167782, %v951
  %v964 = vor.u32 %v962, %v963
  %v965 = vshll.u32 920167782, %v950
  %v966 = vshrl.u32 1326507024, %v951
  %v967 = vor.u32 %v965, %v966
  %vm968 = vcmp.lt.s32.totalorder %v949, 1
  %vm969 = vcmp.lt.s32.totalorder %v949, 2
  %vm970 = vcmp.lt.s32.totalorder %v949, 3
  %vm971 = vcmp.lt.s32.totalorder %v949, 4
  %v972 = vsel %vm968, %v952, %v955
  %v973 = vsel %vm971, %v961, 2102212464
  %v974 = vsel %vm970, %v958, %v973
  %v975 = vsel %vm969, %v972, %v974
  %v976 = vsel %vm968, %v955, %v958
  %v977 = vsel %vm971, %v964, 920167782
  %v978 = vsel %vm970, %v961, %v977
  %v979 = vsel %vm969, %v976, %v978
  %v980 = vsel %vm968, %v958, %v961
  %v981 = vsel %vm971, %v967, 1326507024
  %v982 = vsel %vm970, %v964, %v981
  %v983 = vsel %vm969, %v980, %v982
  %v984 = vshll.u32 %v944, 8
  %v985 = vmul.u32.u64.compose %v984, %v983
  %v986 = vextract.low.u32 %v985
  %v987 = vextract.high.u32 %v985
  %v988 = vmul.u32.u64.compose %v984, %v979
  %v989 = vextract.low.u32 %v988
  %v990 = vextract.high.u32 %v988
  %v991 = vmul.u32 %v984, %v975
  %v992 = vadd.s32 %v987, %v989
  %vm993 = vc.u32 %v987, %v989
  %v994 = vadd.s32 %v990, 1
  %v995 = vsel %vm993, %v994, %v990
  %v996 = vadd.s32 %v991, %v995
  %v997 = vadd.s32 %v996, 536870912
  %v998 = vshrl.u32 %v997, 30
  %v999 = vshll.u32 %v998, 30
  %v1000 = vsub.s32 %v996, %v999
  %vm1001 = vcmp.lt.s32.totalorder %v1000, 0
  %v1002 = vsub.s32 0, %v1000
  %v1003 = vsel %vm1001, %v1002, %v1000
  %v1004 = vclz %v1003
  %v1005 = vsub.s32 %v1004, 2
  %vm1006 = vcmp.gt.s32.totalorder 0, %v1005
  %v1007 = vsel %vm1006, 0, %v1005
  %v1008 = vsub.s32 32, %v1007
  %v1009 = vshll.u32 %v1000, %v1007
  %v1010 = vshrl.u32 %v992, %v1008
  %v1011 = vor.u32 %v1009, %v1010
  %v1012 = vsub.s32 4294967266, %v1007
  %v1013 = vadd.s32 %v1012, 127
  %v1014 = vshll.u32 %v1013, 23
  %v1015 = vor.u32 4788187, %v1014
  %v1016 = vand.u32 2147483647, %v1015
  %v1018 = vcvt.s32.f32 %v1011
  %v1019 = vmul.f32 %v1018, %v1016
  %v1020 = vxor.u32 %v1019, 2147483648
  %v1021 = vsel %vm938, %v1020, %v1019
  %v1022 = vsub.s32 4, %v998
  %v1023 = vsel %vm938, %v1022, %v998
  %v1024 = vsel %vm937, %v932, %v1021
  %v1025 = vsel %vm937, 0, %v1023
  %v1026 = vcosq.f32.pop %v1024
  %v1027 = vsinq.f32.pop %v1024
  %vm1028 = vweird.f32 %v932
  %v1029 = vadd.s32 %v1025, 3
  %v1030 = vand.u32 %v1029, 3
  %vm1031 = vcmp.lt.s32.totalorder %v1030, 2
  %vm1032 = vcmp.eq.s32.totalorder %v1030, 0
  %v1033 = vxor.u32 %v1027, 2147483648
  %v1034 = vsel %vm1032, %v1026, %v1033
  %vm1035 = vcmp.eq.s32.totalorder %v1030, 2
  %v1036 = vxor.u32 %v1026, 2147483648
  %v1037 = vsel %vm1035, %v1036, %v1027
  %v1038 = vsel %vm1031, %v1034, %v1037
  %v1039 = vsel %vm1028, nan, %v1038
  %v1040 = vand.u32 2147483647, %v933
  %vm1041 = vcmp.le.f32.partialorder %v1040, 0.7853982
  %vm1042 = vcmp.lt.s32.totalorder %v933, 0
  %v1043 = vand.u32 %v933, 2139095040
  %v1044 = vshrl.u32 %v1043, 23
  %v1045 = vsub.s32 %v1044, 127
  %v1046 = vand.u32 2147483647, %v933
  %v1047 = vand.u32 %v1046, 8388607
  %v1048 = vor.u32 %v1047, 8388608
  %v1049 = vsub.s32 0, %v1048
  %v1050 = vadd.s32 %v1045, 1
  %vm1051 = vcmp.gt.s32.totalorder %v1050, 0
  %v1052 = vsel %vm1051, %v1050, 0
  %v1053 = vshrl.u32 %v1052, 5
  %v1054 = vand.u32 %v1052, 31
  %v1055 = vsub.s32 32, %v1054
  %v1056 = vshrl.u32 683565275, %v1055
  %v1057 = vshll.u32 683565275, %v1054
  %v1058 = vshrl.u32 2475754826, %v1055
  %v1059 = vor.u32 %v1057, %v1058
  %v1060 = vshll.u32 2475754826, %v1054
  %v1061 = vshrl.u32 2131351028, %v1055
  %v1062 = vor.u32 %v1060, %v1061
  %v1063 = vshll.u32 2131351028, %v1054
  %v1064 = vshrl.u32 2102212464, %v1055
  %v1065 = vor.u32 %v1063, %v1064
  %v1066 = vshll.u32 2102212464, %v1054
  %v1067 = vshrl.u32 920167782, %v1055
  %v1068 = vor.u32 %v1066, %v1067
  %v1069 = vshll.u32 920167782, %v1054
  %v1070 = vshrl.u32 1326507024, %v1055
  %v1071 = vor.u32 %v1069, %v1070
  %vm1072 = vcmp.lt.s32.totalorder %v1053, 1
  %vm1073 = vcmp.lt.s32.totalorder %v1053, 2
  %vm1074 = vcmp.lt.s32.totalorder %v1053, 3
  %vm1075 = vcmp.lt.s32.totalorder %v1053, 4
  %v1076 = vsel %vm1072, %v1056, %v1059
  %v1077 = vsel %vm1075, %v1065, 2102212464
  %v1078 = vsel %vm1074, %v1062, %v1077
  %v1079 = vsel %vm1073, %v1076, %v1078
  %v1080 = vsel %vm1072, %v1059, %v1062
  %v1081 = vsel %vm1075, %v1068, 920167782
  %v1082 = vsel %vm1074, %v1065, %v1081
  %v1083 = vsel %vm1073, %v1080, %v1082
  %v1084 = vsel %vm1072, %v1062, %v1065
  %v1085 = vsel %vm1075, %v1071, 1326507024
  %v1086 = vsel %vm1074, %v1068, %v1085
  %v1087 = vsel %vm1073, %v1084, %v1086
  %v1088 = vshll.u32 %v1048, 8
  %v1089 = vmul.u32.u64.compose %v1088, %v1087
  %v1090 = vextract.low.u32 %v1089
  %v1091 = vextract.high.u32 %v1089
  %v1092 = vmul.u32.u64.compose %v1088, %v1083
  %v1093 = vextract.low.u32 %v1092
  %v1094 = vextract.high.u32 %v1092
  %v1095 = vmul.u32 %v1088, %v1079
  %v1096 = vadd.s32 %v1091, %v1093
  %vm1097 = vc.u32 %v1091, %v1093
  %v1098 = vadd.s32 %v1094, 1
  %v1099 = vsel %vm1097, %v1098, %v1094
  %v1100 = vadd.s32 %v1095, %v1099
  %v1101 = vadd.s32 %v1100, 536870912
  %v1102 = vshrl.u32 %v1101, 30
  %v1103 = vshll.u32 %v1102, 30
  %v1104 = vsub.s32 %v1100, %v1103
  %vm1105 = vcmp.lt.s32.totalorder %v1104, 0
  %v1106 = vsub.s32 0, %v1104
  %v1107 = vsel %vm1105, %v1106, %v1104
  %v1108 = vclz %v1107
  %v1109 = vsub.s32 %v1108, 2
  %vm1110 = vcmp.gt.s32.totalorder 0, %v1109
  %v1111 = vsel %vm1110, 0, %v1109
  %v1112 = vsub.s32 32, %v1111
  %v1113 = vshll.u32 %v1104, %v1111
  %v1114 = vshrl.u32 %v1096, %v1112
  %v1115 = vor.u32 %v1113, %v1114
  %v1116 = vsub.s32 4294967266, %v1111
  %v1117 = vadd.s32 %v1116, 127
  %v1118 = vshll.u32 %v1117, 23
  %v1119 = vor.u32 4788187, %v1118
  %v1120 = vand.u32 2147483647, %v1119
  %v1122 = vcvt.s32.f32 %v1115
  %v1123 = vmul.f32 %v1122, %v1120
  %v1124 = vxor.u32 %v1123, 2147483648
  %v1125 = vsel %vm1042, %v1124, %v1123
  %v1126 = vsub.s32 4, %v1102
  %v1127 = vsel %vm1042, %v1126, %v1102
  %v1128 = vsel %vm1041, %v933, %v1125
  %v1129 = vsel %vm1041, 0, %v1127
  %v1130 = vcosq.f32.pop %v1128
  %v1131 = vsinq.f32.pop %v1128
  %vm1132 = vweird.f32 %v933
  %v1133 = vadd.s32 %v1129, 3
  %v1134 = vand.u32 %v1133, 3
  %vm1135 = vcmp.lt.s32.totalorder %v1134, 2
  %vm1136 = vcmp.eq.s32.totalorder %v1134, 0
  %v1137 = vxor.u32 %v1131, 2147483648
  %v1138 = vsel %vm1136, %v1130, %v1137
  %vm1139 = vcmp.eq.s32.totalorder %v1134, 2
  %v1140 = vxor.u32 %v1130, 2147483648
  %v1141 = vsel %vm1139, %v1140, %v1131
  %v1142 = vsel %vm1135, %v1138, %v1141
  %v1143 = vsel %vm1132, nan, %v1142
  %v1144 = vand.u32 2147483647, %v934
  %vm1145 = vcmp.le.f32.partialorder %v1144, 0.7853982
  %vm1146 = vcmp.lt.s32.totalorder %v934, 0
  %v1147 = vand.u32 %v934, 2139095040
  %v1148 = vshrl.u32 %v1147, 23
  %v1149 = vsub.s32 %v1148, 127
  %v1150 = vand.u32 2147483647, %v934
  %v1151 = vand.u32 %v1150, 8388607
  %v1152 = vor.u32 %v1151, 8388608
  %v1153 = vsub.s32 0, %v1152
  %v1154 = vadd.s32 %v1149, 1
  %vm1155 = vcmp.gt.s32.totalorder %v1154, 0
  %v1156 = vsel %vm1155, %v1154, 0
  %v1157 = vshrl.u32 %v1156, 5
  %v1158 = vand.u32 %v1156, 31
  %v1159 = vsub.s32 32, %v1158
  %v1160 = vshrl.u32 683565275, %v1159
  %v1161 = vshll.u32 683565275, %v1158
  %v1162 = vshrl.u32 2475754826, %v1159
  %v1163 = vor.u32 %v1161, %v1162
  %v1164 = vshll.u32 2475754826, %v1158
  %v1165 = vshrl.u32 2131351028, %v1159
  %v1166 = vor.u32 %v1164, %v1165
  %v1167 = vshll.u32 2131351028, %v1158
  %v1168 = vshrl.u32 2102212464, %v1159
  %v1169 = vor.u32 %v1167, %v1168
  %v1170 = vshll.u32 2102212464, %v1158
  %v1171 = vshrl.u32 920167782, %v1159
  %v1172 = vor.u32 %v1170, %v1171
  %v1173 = vshll.u32 920167782, %v1158
  %v1174 = vshrl.u32 1326507024, %v1159
  %v1175 = vor.u32 %v1173, %v1174
  %vm1176 = vcmp.lt.s32.totalorder %v1157, 1
  %vm1177 = vcmp.lt.s32.totalorder %v1157, 2
  %vm1178 = vcmp.lt.s32.totalorder %v1157, 3
  %vm1179 = vcmp.lt.s32.totalorder %v1157, 4
  %v1180 = vsel %vm1176, %v1160, %v1163
  %v1181 = vsel %vm1179, %v1169, 2102212464
  %v1182 = vsel %vm1178, %v1166, %v1181
  %v1183 = vsel %vm1177, %v1180, %v1182
  %v1184 = vsel %vm1176, %v1163, %v1166
  %v1185 = vsel %vm1179, %v1172, 920167782
  %v1186 = vsel %vm1178, %v1169, %v1185
  %v1187 = vsel %vm1177, %v1184, %v1186
  %v1188 = vsel %vm1176, %v1166, %v1169
  %v1189 = vsel %vm1179, %v1175, 1326507024
  %v1190 = vsel %vm1178, %v1172, %v1189
  %v1191 = vsel %vm1177, %v1188, %v1190
  %v1192 = vshll.u32 %v1152, 8
  %v1193 = vmul.u32.u64.compose %v1192, %v1191
  %v1194 = vextract.low.u32 %v1193
  %v1195 = vextract.high.u32 %v1193
  %v1196 = vmul.u32.u64.compose %v1192, %v1187
  %v1197 = vextract.low.u32 %v1196
  %v1198 = vextract.high.u32 %v1196
  %v1199 = vmul.u32 %v1192, %v1183
  %v1200 = vadd.s32 %v1195, %v1197
  %vm1201 = vc.u32 %v1195, %v1197
  %v1202 = vadd.s32 %v1198, 1
  %v1203 = vsel %vm1201, %v1202, %v1198
  %v1204 = vadd.s32 %v1199, %v1203
  %v1205 = vadd.s32 %v1204, 536870912
  %v1206 = vshrl.u32 %v1205, 30
  %v1207 = vshll.u32 %v1206, 30
  %v1208 = vsub.s32 %v1204, %v1207
  %vm1209 = vcmp.lt.s32.totalorder %v1208, 0
  %v1210 = vsub.s32 0, %v1208
  %v1211 = vsel %vm1209, %v1210, %v1208
  %v1212 = vclz %v1211
  %v1213 = vsub.s32 %v1212, 2
  %vm1214 = vcmp.gt.s32.totalorder 0, %v1213
  %v1215 = vsel %vm1214, 0, %v1213
  %v1216 = vsub.s32 32, %v1215
  %v1217 = vshll.u32 %v1208, %v1215
  %v1218 = vshrl.u32 %v1200, %v1216
  %v1219 = vor.u32 %v1217, %v1218
  %v1220 = vsub.s32 4294967266, %v1215
  %v1221 = vadd.s32 %v1220, 127
  %v1222 = vshll.u32 %v1221, 23
  %v1223 = vor.u32 4788187, %v1222
  %v1224 = vand.u32 2147483647, %v1223
  %v1226 = vcvt.s32.f32 %v1219
  %v1227 = vmul.f32 %v1226, %v1224
  %v1228 = vxor.u32 %v1227, 2147483648
  %v1229 = vsel %vm1146, %v1228, %v1227
  %v1230 = vsub.s32 4, %v1206
  %v1231 = vsel %vm1146, %v1230, %v1206
  %v1232 = vsel %vm1145, %v934, %v1229
  %v1233 = vsel %vm1145, 0, %v1231
  %v1234 = vcosq.f32.pop %v1232
  %v1235 = vsinq.f32.pop %v1232
  %vm1236 = vweird.f32 %v934
  %v1237 = vadd.s32 %v1233, 3
  %v1238 = vand.u32 %v1237, 3
  %vm1239 = vcmp.lt.s32.totalorder %v1238, 2
  %vm1240 = vcmp.eq.s32.totalorder %v1238, 0
  %v1241 = vxor.u32 %v1235, 2147483648
  %v1242 = vsel %vm1240, %v1234, %v1241
  %vm1243 = vcmp.eq.s32.totalorder %v1238, 2
  %v1244 = vxor.u32 %v1234, 2147483648
  %v1245 = vsel %vm1243, %v1244, %v1235
  %v1246 = vsel %vm1239, %v1242, %v1245
  %v1247 = vsel %vm1236, nan, %v1246
  %v1248 = vand.u32 2147483647, %v935
  %vm1249 = vcmp.le.f32.partialorder %v1248, 0.7853982
  %vm1250 = vcmp.lt.s32.totalorder %v935, 0
  %v1251 = vand.u32 %v935, 2139095040
  %v1252 = vshrl.u32 %v1251, 23
  %v1253 = vsub.s32 %v1252, 127
  %v1254 = vand.u32 2147483647, %v935
  %v1255 = vand.u32 %v1254, 8388607
  %v1256 = vor.u32 %v1255, 8388608
  %v1257 = vsub.s32 0, %v1256
  %v1258 = vadd.s32 %v1253, 1
  %vm1259 = vcmp.gt.s32.totalorder %v1258, 0
  %v1260 = vsel %vm1259, %v1258, 0
  %v1261 = vshrl.u32 %v1260, 5
  %v1262 = vand.u32 %v1260, 31
  %v1263 = vsub.s32 32, %v1262
  %v1264 = vshrl.u32 683565275, %v1263
  %v1265 = vshll.u32 683565275, %v1262
  %v1266 = vshrl.u32 2475754826, %v1263
  %v1267 = vor.u32 %v1265, %v1266
  %v1268 = vshll.u32 2475754826, %v1262
  %v1269 = vshrl.u32 2131351028, %v1263
  %v1270 = vor.u32 %v1268, %v1269
  %v1271 = vshll.u32 2131351028, %v1262
  %v1272 = vshrl.u32 2102212464, %v1263
  %v1273 = vor.u32 %v1271, %v1272
  %v1274 = vshll.u32 2102212464, %v1262
  %v1275 = vshrl.u32 920167782, %v1263
  %v1276 = vor.u32 %v1274, %v1275
  %v1277 = vshll.u32 920167782, %v1262
  %v1278 = vshrl.u32 1326507024, %v1263
  %v1279 = vor.u32 %v1277, %v1278
  %vm1280 = vcmp.lt.s32.totalorder %v1261, 1
  %vm1281 = vcmp.lt.s32.totalorder %v1261, 2
  %vm1282 = vcmp.lt.s32.totalorder %v1261, 3
  %vm1283 = vcmp.lt.s32.totalorder %v1261, 4
  %v1284 = vsel %vm1280, %v1264, %v1267
  %v1285 = vsel %vm1283, %v1273, 2102212464
  %v1286 = vsel %vm1282, %v1270, %v1285
  %v1287 = vsel %vm1281, %v1284, %v1286
  %v1288 = vsel %vm1280, %v1267, %v1270
  %v1289 = vsel %vm1283, %v1276, 920167782
  %v1290 = vsel %vm1282, %v1273, %v1289
  %v1291 = vsel %vm1281, %v1288, %v1290
  %v1292 = vsel %vm1280, %v1270, %v1273
  %v1293 = vsel %vm1283, %v1279, 1326507024
  %v1294 = vsel %vm1282, %v1276, %v1293
  %v1295 = vsel %vm1281, %v1292, %v1294
  %v1296 = vshll.u32 %v1256, 8
  %v1297 = vmul.u32.u64.compose %v1296, %v1295
  %v1298 = vextract.low.u32 %v1297
  %v1299 = vextract.high.u32 %v1297
  %v1300 = vmul.u32.u64.compose %v1296, %v1291
  %v1301 = vextract.low.u32 %v1300
  %v1302 = vextract.high.u32 %v1300
  %v1303 = vmul.u32 %v1296, %v1287
  %v1304 = vadd.s32 %v1299, %v1301
  %vm1305 = vc.u32 %v1299, %v1301
  %v1306 = vadd.s32 %v1302, 1
  %v1307 = vsel %vm1305, %v1306, %v1302
  %v1308 = vadd.s32 %v1303, %v1307
  %v1309 = vadd.s32 %v1308, 536870912
  %v1310 = vshrl.u32 %v1309, 30
  %v1311 = vshll.u32 %v1310, 30
  %v1312 = vsub.s32 %v1308, %v1311
  %vm1313 = vcmp.lt.s32.totalorder %v1312, 0
  %v1314 = vsub.s32 0, %v1312
  %v1315 = vsel %vm1313, %v1314, %v1312
  %v1316 = vclz %v1315
  %v1317 = vsub.s32 %v1316, 2
  %vm1318 = vcmp.gt.s32.totalorder 0, %v1317
  %v1319 = vsel %vm1318, 0, %v1317
  %v1320 = vsub.s32 32, %v1319
  %v1321 = vshll.u32 %v1312, %v1319
  %v1322 = vshrl.u32 %v1304, %v1320
  %v1323 = vor.u32 %v1321, %v1322
  %v1324 = vsub.s32 4294967266, %v1319
  %v1325 = vadd.s32 %v1324, 127
  %v1326 = vshll.u32 %v1325, 23
  %v1327 = vor.u32 4788187, %v1326
  %v1328 = vand.u32 2147483647, %v1327
  %v1330 = vcvt.s32.f32 %v1323
  %v1331 = vmul.f32 %v1330, %v1328
  %v1332 = vxor.u32 %v1331, 2147483648
  %v1333 = vsel %vm1250, %v1332, %v1331
  %v1334 = vsub.s32 4, %v1310
  %v1335 = vsel %vm1250, %v1334, %v1310
  %v1336 = vsel %vm1249, %v935, %v1333
  %v1337 = vsel %vm1249, 0, %v1335
  %v1338 = vcosq.f32.pop %v1336
  %v1339 = vsinq.f32.pop %v1336
  %vm1340 = vweird.f32 %v935
  %v1341 = vadd.s32 %v1337, 3
  %v1342 = vand.u32 %v1341, 3
  %vm1343 = vcmp.lt.s32.totalorder %v1342, 2
  %vm1344 = vcmp.eq.s32.totalorder %v1342, 0
  %v1345 = vxor.u32 %v1339, 2147483648
  %v1346 = vsel %vm1344, %v1338, %v1345
  %vm1347 = vcmp.eq.s32.totalorder %v1342, 2
  %v1348 = vxor.u32 %v1338, 2147483648
  %v1349 = vsel %vm1347, %v1348, %v1339
  %v1350 = vsel %vm1343, %v1346, %v1349
  %v1351 = vsel %vm1340, nan, %v1350
  %v1352 = vmul.f32 %v615, %v1039
  %v1353 = vmul.f32 %v719, %v1143
  %v1354 = vmul.f32 %v823, %v1247
  %v1355 = vmul.f32 %v927, %v1351
  %v1356 = vand.u32 2147483647, %v195
  %v1357 = vand.u32 2147483647, %v299
  %v1358 = vand.u32 2147483647, %v403
  %v1359 = vand.u32 2147483647, %v507
  %vm1360 = vcmp.gt.f32.partialorder %v1356, 0.0001
  %vm1361 = vcmp.gt.f32.partialorder %v1357, 0.0001
  %vm1362 = vcmp.gt.f32.partialorder %v1358, 0.0001
  %vm1363 = vcmp.gt.f32.partialorder %v1359, 0.0001
  %v1364 = vsel %vm1360, %v195, 1.0
  %v1365 = vsel %vm1361, %v299, 1.0
  %v1366 = vsel %vm1362, %v403, 1.0
  %v1367 = vsel %vm1363, %v507, 1.0
  %vm1368 = vcmp.gt.f32.partialorder %v28, 0.5
  %vm1369 = vcmp.gt.f32.partialorder %v29, 0.5
  %vm1370 = vcmp.gt.f32.partialorder %v30, 0.5
  %vm1371 = vcmp.gt.f32.partialorder %v31, 0.5
  %v1372 = vsub.f32 %v28, 1.0
  %v1373 = vsub.f32 %v29, 1.0
  %v1374 = vsub.f32 %v30, 1.0
  %v1375 = vsub.f32 %v31, 1.0
  %v1376 = vsel %vm1368, %v1372, %v28
  %v1377 = vsel %vm1369, %v1373, %v29
  %v1378 = vsel %vm1370, %v1374, %v30
  %v1379 = vsel %vm1371, %v1375, %v31
  %v1380 = vmul.f32 %v1376, 6.2831855
  %v1381 = vmul.f32 %v1377, 6.2831855
  %v1382 = vmul.f32 %v1378, 6.2831855
  %v1383 = vmul.f32 %v1379, 6.2831855
  %v1384 = vmul.f32 %v88, 0.5
  %v1385 = vmul.f32 %v89, 0.5
  %v1386 = vmul.f32 %v90, 0.5
  %v1387 = vmul.f32 %v91, 0.5
  %v1388 = vmul.f32 %v1384, %v928
  %v1389 = vmul.f32 %v1385, %v929
  %v1390 = vmul.f32 %v1386, %v930
  %v1391 = vmul.f32 %v1387, %v931
  %v1392 = vmul.f32 %v1380, %v1388
  %v1393 = vmul.f32 %v1381, %v1389
  %v1394 = vmul.f32 %v1382, %v1390
  %v1395 = vmul.f32 %v1383, %v1391
  %v1396 = vrcp.pop %v1364
  %v1397 = vmul.f32 %v1352, %v1396
  %v1398 = vrcp.pop %v1365
  %v1399 = vmul.f32 %v1353, %v1398
  %v1400 = vrcp.pop %v1366
  %v1401 = vmul.f32 %v1354, %v1400
  %v1402 = vrcp.pop %v1367
  %v1403 = vmul.f32 %v1355, %v1402
  %v1404 = vsel %vm1360, %v1397, %v1392
  %v1405 = vsel %vm1361, %v1399, %v1393
  %v1406 = vsel %vm1362, %v1401, %v1394
  %v1407 = vsel %vm1363, %v1403, %v1395
  %v1408 = vadd.f32 %v14, %v14
  %v1409 = vadd.f32 %v15, %v15
  %v1410 = vadd.f32 %v16, %v16
  %v1411 = vadd.f32 %v17, %v17
  %v1412 = vrsqrt.pop %v1408
  %v1413 = vmul.f32 %v1408, %v1412
  %vm1414 = vcmp.eq.f32.partialorder %v1408, inf
  %v1415 = vsel %vm1414, %v1408, %v1413
  %vm1416 = vcmp.eq.f32.partialorder %v1408, 0.0
  %v1417 = vand.u32 %v1408, 2147483648
  %v1418 = vsel %vm1416, %v1417, %v1415
  %v1419 = vrsqrt.pop %v1409
  %v1420 = vmul.f32 %v1409, %v1419
  %vm1421 = vcmp.eq.f32.partialorder %v1409, inf
  %v1422 = vsel %vm1421, %v1409, %v1420
  %vm1423 = vcmp.eq.f32.partialorder %v1409, 0.0
  %v1424 = vand.u32 %v1409, 2147483648
  %v1425 = vsel %vm1423, %v1424, %v1422
  %v1426 = vrsqrt.pop %v1410
  %v1427 = vmul.f32 %v1410, %v1426
  %vm1428 = vcmp.eq.f32.partialorder %v1410, inf
  %v1429 = vsel %vm1428, %v1410, %v1427
  %vm1430 = vcmp.eq.f32.partialorder %v1410, 0.0
  %v1431 = vand.u32 %v1410, 2147483648
  %v1432 = vsel %vm1430, %v1431, %v1429
  %v1433 = vrsqrt.pop %v1411
  %v1434 = vmul.f32 %v1411, %v1433
  %vm1435 = vcmp.eq.f32.partialorder %v1411, inf
  %v1436 = vsel %vm1435, %v1411, %v1434
  %vm1437 = vcmp.eq.f32.partialorder %v1411, 0.0
  %v1438 = vand.u32 %v1411, 2147483648
  %v1439 = vsel %vm1437, %v1438, %v1436
  %v1440 = vmul.f32 %v1418, %v1404
  %v1441 = vmul.f32 %v1425, %v1405
  %v1442 = vmul.f32 %v1432, %v1406
  %v1443 = vmul.f32 %v1439, %v1407
  %s1444 = smul.addr %s11, 8
  %s1445 = scalar_lea.vmem %s2, %s1444
  %1446 = vst [vmem:[%s1445] sm:$0xff] %v1440
  %1447 = vst [vmem:[%s1445 + $0x8] sm:$0xff] %v1441
  %1448 = vst [vmem:[%s1445 + $0x10] sm:$0xff] %v1442
  %1449 = vst [vmem:[%s1445 + $0x18] sm:$0xff] %v1443
  // Predicated region
  $region10: #{additive_pulse_train.1} parent=0 // pred_check
    _
  $region11: #{additive_pulse_train.1} parent=0 // pred_check_branch
    %1451 = sbr.rel (0) target = $region13
  $region12: #{additive_pulse_train.1} parent=0 // pred_region
    _
  $region13: #{additive_pulse_train.1} parent=0 // pred_fallthru
    _
  // Predicated region
  $region14: #{additive_pulse_train.1} parent=0 // pred_check
    _
  $region15: #{additive_pulse_train.1} parent=0 // pred_check_branch
    %1453 = sbr.rel (0) target = $region17
  $region16: #{additive_pulse_train.1} parent=0 // pred_region
    _
  $region17: #{additive_pulse_train.1} parent=0 // pred_fallthru
    _

</llo_original>
